<compile_context>
chip_gen: v6e
topology: v6e:2x2x1
jax: 0.10.0
libtpu: 0.0.40
codegen_flags: <defaults>
</compile_context>

<pallas_src>
import functools

import jax
import jax.numpy as jnp
from jax.experimental import pallas as pl
from jax.experimental.pallas import tpu as pltpu

SUBLANE = 8
LANE = 128
# ~2 MiB per block; in+out each double-buffered -> ~8 MiB VMEM, fits every gen.
_TARGET_BLOCK_BYTES = 2 * 1024 * 1024


def _window_kernel(x_ref, o_ref, *, lower, upper, sigma):
    # Upcast to f32 so exp/reciprocal run at full precision even for bf16
    # inputs (v5e EUP/VPU have no native bf16 path).
    x = x_ref[...].astype(jnp.float32)
    # sigmoid(a) * sigmoid(b) == 1 / ((1 + e^-a) * (1 + e^-b))
    #   -> 2 exps + 1 reciprocal instead of 2 exps + 2 divides (less EUP work).
    d = (1.0 + jnp.exp((lower - x) * sigma)) * (1.0 + jnp.exp((x - upper) * sigma))
    out = jnp.maximum(pl.reciprocal(d), 1e-10)  # clamp in f32 before downcast
    o_ref[...] = out.astype(o_ref.dtype)


def _run_2d(x2d, lower, upper, sigma):
    rows, width = x2d.shape
    itemsize = jnp.dtype(x2d.dtype).itemsize
    # Largest multiple-of-8 row tile that keeps the block near the target size.
    target_rows = max(
        SUBLANE, (_TARGET_BLOCK_BYTES // (width * itemsize)) // SUBLANE * SUBLANE
    )
    row_tile = min(rows, target_rows)
    grid = (pl.cdiv(rows, row_tile),)

    kernel = functools.partial(
        _window_kernel,
        lower=float(lower),
        upper=float(upper),
        sigma=float(sigma),
    )

    return pl.pallas_call(
        kernel,
        out_shape=jax.ShapeDtypeStruct((rows, width), x2d.dtype),
        grid=grid,
        in_specs=[pl.BlockSpec((row_tile, width), lambda i: (i, 0))],
        out_specs=pl.BlockSpec((row_tile, width), lambda i: (i, 0)),
        compiler_params=pltpu.CompilerParams(
            dimension_semantics=("parallel",)
        ),
    )(x2d)


def window_pallas(x, lower, upper, sigma):
    """Apply the Window function elementwise via a Pallas TPU kernel."""
    orig_shape = x.shape
    n = x.size
    if n == 0:
        return x

    # Fast path: widest lane-dense layout that divides n exactly -> no pad,
    # no slice, just metadata reshapes around the kernel.
    for width in (8 * LANE, 4 * LANE, 2 * LANE, LANE):
        if n % (SUBLANE * width) == 0:
            out2d = _run_2d(x.reshape(n // width, width), lower, upper, sigma)
            return out2d.reshape(orig_shape)

    # Ragged fallback: pad the flat tail to one (8,128) tile, slice afterwards.
    # TODO(synk): replace pad/slice with an in-kernel masked tail store.
    width = LANE
    n_pad = pl.cdiv(n, SUBLANE * width) * (SUBLANE * width)
    x_flat = jnp.pad(jnp.ravel(x), (0, n_pad - n))
    out2d = _run_2d(x_flat.reshape(n_pad // width, width), lower, upper, sigma)
    return out2d.reshape(-1)[:n].reshape(orig_shape)


def window_ref(x, lower, upper, sigma):
    """Pure-JAX reference mirroring the PyTorch forward."""
    return jnp.maximum(
        jax.nn.sigmoid((x - lower) * sigma) * jax.nn.sigmoid((upper - x) * sigma),
        1e-10,
    )


if __name__ == "__main__":
    key = jax.random.PRNGKey(0)

    # Deterministic "module parameters" (Window.__init__ args), set in-script.
    lower, upper, sigma = -1.0, 1.0, 10.0

    # Small NCHW input (fast path: divisible element count).
    x = jax.random.uniform(
        key, (2, 4, 16, 16), dtype=jnp.float32, minval=-2.0, maxval=2.0
    )
    out = jax.block_until_ready(window_pallas(x, lower, upper, sigma))
    ref = window_ref(x, lower, upper, sigma)
    assert out.shape == x.shape and out.dtype == x.dtype
    assert jnp.allclose(out, ref, atol=1e-6, rtol=1e-5)

    # Ragged shape to exercise the pad/slice fallback path.
    k2 = jax.random.split(key)[0]
    x2 = jax.random.uniform(k2, (3, 5, 7), dtype=jnp.float32, minval=-2.0, maxval=2.0)
    out2 = jax.block_until_ready(window_pallas(x2, lower, upper, sigma))
    ref2 = window_ref(x2, lower, upper, sigma)
    assert out2.shape == x2.shape and out2.dtype == x2.dtype
    assert jnp.allclose(out2, ref2, atol=1e-6, rtol=1e-5)

    print("KERNEL_OK")
</pallas_src>

<mosaic_0001>
module attributes {stable_mosaic.version = 11 : i64} {
  func.func @_window_kernel(%arg0: i32, %arg1: memref<8x256xf32, #tpu.memory_space<vmem>>, %arg2: memref<8x256xf32, #tpu.memory_space<vmem>>) attributes {dimension_semantics = [#tpu.dimension_semantics<parallel>], iteration_bounds = array<i64: 1>, scalar_prefetch = 0 : i64, scratch_operands = 0 : i64, tpu.core_type = #tpu.core_type<tc>, window_params = [{transform_indices = @transform_0, window_bounds = array<i64: 8, 256>}, {transform_indices = @transform_1, window_bounds = array<i64: 8, 256>}]} {
    %c0 = arith.constant 0 : index
    %c0_0 = arith.constant 0 : index
    %0 = vector.load %arg1[%c0, %c0_0] : memref<8x256xf32, #tpu.memory_space<vmem>>, vector<8x256xf32>
    %cst = arith.constant -1.000000e+00 : f32
    %1 = vector.broadcast %cst : f32 to vector<8x256xf32>
    %2 = arith.subf %1, %0 : vector<8x256xf32>
    %cst_1 = arith.constant 1.000000e+01 : f32
    %3 = vector.broadcast %cst_1 : f32 to vector<8x256xf32>
    %4 = arith.mulf %2, %3 : vector<8x256xf32>
    %5 = math.exp %4 : vector<8x256xf32>
    %cst_2 = arith.constant 1.000000e+00 : f32
    %6 = vector.broadcast %cst_2 : f32 to vector<8x256xf32>
    %7 = arith.addf %6, %5 : vector<8x256xf32>
    %cst_3 = arith.constant 1.000000e+00 : f32
    %8 = vector.broadcast %cst_3 : f32 to vector<8x256xf32>
    %9 = arith.subf %0, %8 : vector<8x256xf32>
    %cst_4 = arith.constant 1.000000e+01 : f32
    %10 = vector.broadcast %cst_4 : f32 to vector<8x256xf32>
    %11 = arith.mulf %9, %10 : vector<8x256xf32>
    %12 = math.exp %11 : vector<8x256xf32>
    %cst_5 = arith.constant 1.000000e+00 : f32
    %13 = vector.broadcast %cst_5 : f32 to vector<8x256xf32>
    %14 = arith.addf %13, %12 : vector<8x256xf32>
    %15 = arith.mulf %7, %14 : vector<8x256xf32>
    %16 = tpu.reciprocal %15 : vector<8x256xf32> -> vector<8x256xf32>
    %cst_6 = arith.constant 1.000000e-10 : f32
    %17 = vector.broadcast %cst_6 : f32 to vector<8x256xf32>
    %18 = arith.maximumf %16, %17 : vector<8x256xf32>
    %c0_7 = arith.constant 0 : index
    %c0_8 = arith.constant 0 : index
    %19 = vector.load %arg2[%c0_7, %c0_8] : memref<8x256xf32, #tpu.memory_space<vmem>>, vector<8x256xf32>
    tpu.vector_store %arg2[%c0_7, %c0_8], %18 {strides = array<i32>} : memref<8x256xf32, #tpu.memory_space<vmem>>, vector<8x256xf32>,
    return
  }
  func.func @transform_0(%arg0: i32) -> (i32, i32) {
    %c0_i32 = arith.constant 0 : i32
    %c0_i32_0 = arith.constant 0 : i32
    return %arg0, %c0_i32 : i32, i32
  }
  func.func @transform_1(%arg0: i32) -> (i32, i32) {
    %c0_i32 = arith.constant 0 : i32
    %c0_i32_0 = arith.constant 0 : i32
    return %arg0, %c0_i32 : i32, i32
  }
}

</mosaic_0001>

<llo_original>
// kernel: tpu_custom_call.1
$region0: #{tpu_custom_call.1}
  #allocation0 [shape = 'u32[]', space=smem, size = 0x4, offset = 0x4, fixed_abs, tag = 'smem constant byte address 0x4 - core index']
  #allocation1 [shape = 'u32[144,128]{1,0:T(1,128)}', space=vmem, size = 0x12000, scoped, tag = 'internal scratch']
  %s0 = inlined_call_operand.hbm [shape: f32[8,256], index: 0, kind: input, shape index: {}]
  %s1 = inlined_call_operand.hbm [shape: f32[8,256], index: 1, kind: output, shape index: {}]
  %s2 = sld [smem:[#allocation0]]
  $region18: #{tpu_custom_call.1} parent=0
    _
  %s4 = ssub.s32 1, %s2
  %s5 = scalar_select 0, %s4, %s2
  $region1: #{tpu_custom_call.1} parent=0
    #allocation2 [shape = 'u8[8192]{0}', space=vmem, size = 0x2000, scoped, tag = 'input window, operand 0, single buffered']
    #allocation3 [shape = 's32[1]{0}', space=sflag, size = 0x4, scoped, tag = 'scoped memory for tpu_custom_call.1']
    #allocation4 [shape = 's32[1]{0}', space=sflag, size = 0x4, scoped, tag = 'scoped memory for tpu_custom_call.1']
    #allocation5 [shape = 'u8[8192]{0}', space=vmem, size = 0x2000, scoped, tag = 'output window, operand 0, single buffered']
    %6 = vsyncpa [#allocation3], 0
    %7 = vsyncpa [#allocation4], 0
    // Predicated region
    $region2: #{tpu_custom_call.1} parent=1 // pred_check
      _
    $region3: #{tpu_custom_call.1} parent=1 // pred_check_branch
      %9 = sbr.rel (0) target = $region5
    $region4: #{tpu_custom_call.1} parent=1 // pred_region
      %s11 = ssub.s32 256, 256
      %12 = vsyncadd [#allocation3], %s11
      %s14 = sshll.u32 [#allocation2], 4
      %s15 = int_to_ptr.vmem [resolvable:$true] %s14
      %17 = dma.hbm_to_vmem [thread:$0]  %s0, 256, %s15, [#allocation3]
    $region5: #{tpu_custom_call.1} parent=1 // pred_fallthru
      _
    // Predicated region
    $region6: #{tpu_custom_call.1} parent=1 // pred_check
      _
    $region7: #{tpu_custom_call.1} parent=1 // pred_check_branch
      %19 = sbr.rel (0) target = $region9
    $region8: #{tpu_custom_call.1} parent=1 // pred_region
      %20 = dma.done [#allocation3], 256
    $region9: #{tpu_custom_call.1} parent=1 // pred_fallthru
      _
    %v21 = vld [vmem:[#allocation2] sm:$0xff]
    %v22 = vld [vmem:[#allocation2 + $0x8] sm:$0xff]
    %v23 = vsub.f32 -1.0, %v21
    %v24 = vsub.f32 -1.0, %v22
    %v25 = vmul.f32 %v23, 10.0
    %v26 = vmul.f32 %v24, 10.0
    %v27 = vmul.f32 %v25, 1.442695
    %v28 = vpow.pop %v27
    %v29 = vmul.f32 %v26, 1.442695
    %v30 = vpow.pop %v29
    %v31 = vadd.f32 %v28, 1.0
    %v32 = vadd.f32 %v30, 1.0
    %v33 = vsub.f32 %v21, 1.0
    %v34 = vsub.f32 %v22, 1.0
    %v35 = vmul.f32 %v33, 10.0
    %v36 = vmul.f32 %v34, 10.0
    %v37 = vmul.f32 %v35, 1.442695
    %v38 = vpow.pop %v37
    %v39 = vmul.f32 %v36, 1.442695
    %v40 = vpow.pop %v39
    %v41 = vadd.f32 %v38, 1.0
    %v42 = vadd.f32 %v40, 1.0
    %v43 = vmul.f32 %v31, %v41
    %v44 = vmul.f32 %v32, %v42
    %v45 = vrcp.pop %v43
    %v46 = vrcp.pop %v44
    %v47 = vmax.f32 %v45, 1e-10
    %v48 = vmax.f32 %v46, 1e-10
    %49 = vst [vmem:[#allocation5] sm:$0xff] %v47
    %50 = vst [vmem:[#allocation5 + $0x8] sm:$0xff] %v48
    // Predicated region
    $region10: #{tpu_custom_call.1} parent=1 // pred_check
      _
    $region11: #{tpu_custom_call.1} parent=1 // pred_check_branch
      %52 = sbr.rel (0) target = $region13
    $region12: #{tpu_custom_call.1} parent=1 // pred_region
      %s54 = ssub.s32 256, 256
      %55 = vsyncadd [#allocation4], %s54
      %s57 = sshll.u32 [#allocation5], 4
      %s58 = int_to_ptr.vmem [resolvable:$true] %s57
      %60 = dma.vmem_to_hbm [thread:$0]  %s58, 256, %s1, [#allocation4]
    $region13: #{tpu_custom_call.1} parent=1 // pred_fallthru
      _
    // Predicated region
    $region14: #{tpu_custom_call.1} parent=1 // pred_check
      _
    $region15: #{tpu_custom_call.1} parent=1 // pred_check_branch
      %62 = sbr.rel (0) target = $region17
    $region16: #{tpu_custom_call.1} parent=1 // pred_region
      %63 = dma.done [#allocation4], 256
    $region17: #{tpu_custom_call.1} parent=1 // pred_fallthru
      _
    %64 = vsyncpa [#allocation3], 1
    %65 = vsyncpa [#allocation4], 1

</llo_original>
